<compile_context>
chip_gen: v5e
topology: v5e:2x2
jax: 0.10.0
libtpu: 0.0.40
codegen_flags: <defaults>
</compile_context>

<pallas_src>
import functools

import jax
import jax.numpy as jnp
from jax import lax
from jax.experimental import pallas as pl
from jax.experimental.pallas import tpu as pltpu

# ----------------------------- configuration ------------------------------
IN_HIDDEN = 16            # in_hidden_channels (divisible by 8)
MID_HIDDEN = 32           # mid_hidden_channels
LAT = 4                   # sphere_size_lat
LONG = 8                  # sphere_size_long
GROUPS = IN_HIDDEN // 8   # conv groups == GroupNorm groups
OUT_SIZE = 8              # number of target nodes ("length" / out_size)
NUM_EDGES = 10            # rows of x (edge messages)
NUM_SPLAT = 40            # scatter entries for the lat/long projection
EPS = 1e-5                # GroupNorm eps (PyTorch default)

CIN = IN_HIDDEN * LAT             # Conv1d input channels (64)
CIN_G = CIN // GROUPS             # input channels per conv group (32)
COUT_G = MID_HIDDEN // GROUPS     # output channels per conv / GN group (16)
PAD = LONG // 2                   # circular padding (4)

XROWS = (LONG + 2 * PAD) * OUT_SIZE   # 128 rows of circularly padded x
PROW = XROWS                          # bias / gamma / beta rows start (128)
GROW = XROWS + 8                      # G-matrix rows start (136)


# ------------------------------ Pallas kernel ------------------------------
def spinconv_kernel(xz_ref, w_ref, o_ref, *, n, l, cin, mid, eps, prow, grow):
    """Fused circular grouped Conv1d + SiLU + AvgPool1d + GroupNorm.

    xz_ref: f32 [(l+2*pad)*n + 8 + mid, cin]
            rows [0, (l+2*pad)*n): circularly padded conv input, row = j*n + n'
            rows [prow, prow+3):   conv bias / GN gamma / GN beta (lanes [0,mid))
            rows [grow, grow+mid): GroupNorm block-averaging matrix G
    w_ref:  bf16 [l*cin, mid]  per-tap block-diagonal weights, tap k at rows
            [k*cin, (k+1)*cin)
    o_ref:  f32 [n, mid]
    """
    rows = l * n

    # [R1]+[R2] tap loop: static sublane-aligned window views of the padded x,
    # bf16 MXU operands, f32 accumulation.
    acc = jnp.zeros((rows, mid), jnp.float32)
    for k in range(l):                                          # static unroll
        xk = xz_ref[k * n:k * n + rows, :].astype(jnp.bfloat16)  # [l*n, cin]
        wk = w_ref[k * cin:(k + 1) * cin, :]                     # [cin, mid]
        acc = acc + jnp.dot(xk, wk, preferred_element_type=jnp.float32)

    # per-channel parameters: one aligned load, in-vreg row slices (f32)
    pgb = xz_ref[prow:prow + 8, :]                               # [8, cin]
    bias = pgb[0:1, 0:mid]
    gamma = pgb[1:2, 0:mid]
    beta = pgb[2:3, 0:mid]

    conv = acc + bias                                            # [l*n, mid]
    act = conv * jax.nn.sigmoid(conv)                            # SiLU (EUP)

    # AvgPool1d(l): each t-row-block is exactly one sublane group, so this is a
    # pure element-wise vreg reduction (no cross-lane / cross-sublane traffic).
    pooled = jnp.mean(act.reshape(l, n, mid), axis=0)            # [n, mid]

    # [R4] GroupNorm via block-averaging matmuls (no lane sub-slices / concat)
    g_mat = xz_ref[grow:grow + mid, :][:, 0:mid]                 # [mid, mid]
    mu = jnp.dot(pooled, g_mat, preferred_element_type=jnp.float32)
    cen = pooled - mu
    var = jnp.dot(cen * cen, g_mat, preferred_element_type=jnp.float32)
    xhat = cen * lax.rsqrt(var + eps)

    o_ref[...] = xhat * gamma + beta                             # [n, mid]


# ------------------------------- JAX glue ----------------------------------
def _project_onehot(x, length, index, delta, src):
    """[R7] ProjectLatLongSphere.index_add_ as one MXU-friendly matmul."""
    cells = length * LAT * LONG
    splat = x[src]                                               # [S, C]
    idx_all = index.reshape(-1)                                  # [4*S]
    d_all = delta.reshape(-1).astype(jnp.float32)                # [4*S]
    splat_all = jnp.tile(splat, (4, 1))                          # [4*S, C]
    scat = (idx_all[None, :] ==
            jnp.arange(cells, dtype=idx_all.dtype)[:, None]).astype(jnp.float32)
    scat = scat * d_all[None, :]                                 # [cells, 4*S]
    return jnp.dot(scat, splat_all, precision=lax.Precision.HIGHEST)


@jax.jit
def spinconv_block_forward(x, index, delta, src, conv_w, conv_b, gn_gamma, gn_beta):
    n, l, g = OUT_SIZE, LONG, GROUPS

    # --- projection + Conv1d input layout (plain JAX glue, no scatters) ---
    proj = _project_onehot(x, n, index, delta, src)              # [n*LAT*LONG, C]
    # x2[lo*n + n', c*LAT + la] = proj[n'*LAT*LONG + la*LONG + lo, c]
    x4 = proj.reshape(n, LAT, LONG, IN_HIDDEN)
    x2 = jnp.transpose(x4, (2, 0, 3, 1)).reshape(l * n, CIN)     # [l*n, CIN]
    # [R1] circular padding along the t-row-block axis (4 blocks each side)
    xpad = jnp.concatenate([x2[-PAD * n:], x2, x2[:PAD * n]], axis=0)  # [128, 64]

    # per-channel parameters + GroupNorm block-averaging matrix, CIN lanes wide
    params = jnp.stack([conv_b, gn_gamma, gn_beta], axis=0)      # [3, MID]
    params = jnp.pad(params, ((0, 5), (0, CIN - MID_HIDDEN)))    # [8, CIN]
    gidx = jnp.arange(MID_HIDDEN) // COUT_G
    g_mat = (gidx[:, None] == gidx[None, :]).astype(jnp.float32) / COUT_G
    g_mat = jnp.pad(g_mat, ((0, 0), (0, CIN - MID_HIDDEN)))      # [MID, CIN]
    # [R3] single f32 slab: padded x + params + G
    xz = jnp.concatenate([xpad, params, g_mat], axis=0)          # [168, CIN]

    # [R2]+[R3] block-diagonal per-tap conv weights as one bf16 slab [l*CIN, MID]
    wr = conv_w.reshape(g, COUT_G, CIN_G, l)                     # [G, Cout_g, Cin_g, L]
    wt = jnp.transpose(wr, (3, 0, 2, 1))                         # [L, G, Cin_g, Cout_g]
    blocks = [
        jnp.pad(wt[:, gi], ((0, 0), (0, 0),
                            (gi * COUT_G, (g - 1 - gi) * COUT_G)))
        for gi in range(g)
    ]
    wbd = jnp.concatenate(blocks, axis=1)                        # [L, CIN, MID]
    wbd = wbd.reshape(l * CIN, MID_HIDDEN).astype(jnp.bfloat16)  # [512, 32]

    # [R6] TODO(synk): if a model runs many SpinConvBlocks per step, batch them
    # into one pallas_call with a leading grid axis marked "parallel" so both
    # v7x TensorCores get work and the per-call fixed cost is amortized.
    out = pl.pallas_call(
        functools.partial(spinconv_kernel, n=n, l=l, cin=CIN, mid=MID_HIDDEN,
                          eps=EPS, prow=PROW, grow=GROW),
        out_shape=jax.ShapeDtypeStruct((n, MID_HIDDEN), jnp.float32),
        in_specs=[
            pl.BlockSpec(memory_space=pltpu.MemorySpace.VMEM),   # xz slab (f32)
            pl.BlockSpec(memory_space=pltpu.MemorySpace.VMEM),   # weights (bf16)
        ],
        out_specs=pl.BlockSpec(memory_space=pltpu.MemorySpace.VMEM),
    )(xz, wbd)
    return out                                                   # [N, MID_HIDDEN]


# --------------------------- pure-JAX reference -----------------------------
def reference_forward(x, index, delta, src, conv_w, conv_b, gn_gamma, gn_beta,
                      *, bf16_matmul_operands=False):
    """Step-by-step PyTorch-equivalent reference.

    With bf16_matmul_operands=True the conv operands are quantized to bf16 the
    same way the kernel quantizes its MXU operands (accumulation stays f32), so
    the kernel implementation can be checked at tight tolerance.
    """
    n, l, g = OUT_SIZE, LONG, GROUPS
    c = x.shape[1]
    # ProjectLatLongSphere with the original serialized scatter-adds
    splat = x[src]
    xp = jnp.zeros((n * LAT * LONG, c), jnp.float32)
    for i in range(4):
        xp = xp.at[index[i]].add(splat * delta[i][:, None])
    xp = xp.reshape(n, LAT * LONG, c)
    xp = jnp.transpose(xp, (0, 2, 1)).reshape(n, c, LAT, LONG)
    xc = xp.reshape(n, CIN, l)                                   # Conv1d NCL

    wq = conv_w
    if bf16_matmul_operands:
        xc = xc.astype(jnp.bfloat16).astype(jnp.float32)
        wq = conv_w.astype(jnp.bfloat16).astype(jnp.float32)

    xpad = jnp.concatenate([xc[:, :, -PAD:], xc, xc[:, :, :PAD]], axis=-1)
    wr = wq.reshape(g, COUT_G, CIN_G, l)
    outs = []
    for t in range(l):
        win = xpad[:, :, t:t + l].reshape(n, g, CIN_G, l)
        conv_t = jnp.einsum('ngck,gock->ngo', win, wr,
                            precision=lax.Precision.HIGHEST)
        outs.append(conv_t.reshape(n, MID_HIDDEN) + conv_b)
    conv = jnp.stack(outs, axis=-1)                              # [N, mid, L]
    a = jax.nn.silu(conv)
    pooled = a.mean(axis=-1)                                     # [N, mid]
    pg = pooled.reshape(n, g, COUT_G)
    mean = pg.mean(-1, keepdims=True)
    var = ((pg - mean) ** 2).mean(-1, keepdims=True)
    xhat = ((pg - mean) / jnp.sqrt(var + EPS)).reshape(n, MID_HIDDEN)
    return xhat * gn_gamma + gn_beta


# ---------------------------------- main ------------------------------------
if __name__ == "__main__":
    key = jax.random.PRNGKey(0)
    ks = jax.random.split(key, 8)

    # inputs
    x = jax.random.normal(ks[0], (NUM_EDGES, IN_HIDDEN), jnp.float32)
    src = jax.random.randint(ks[1], (NUM_SPLAT,), 0, NUM_EDGES)
    index = jax.random.randint(ks[2], (4, NUM_SPLAT), 0, OUT_SIZE * LAT * LONG)
    delta = jax.random.uniform(ks[3], (4, NUM_SPLAT), jnp.float32)

    # deterministic synthetic parameters (shapes from nn.Conv1d / nn.GroupNorm)
    fan_in = CIN_G * LONG
    bound = 1.0 / (fan_in ** 0.5)
    conv_w = jax.random.uniform(ks[4], (MID_HIDDEN, CIN_G, LONG), jnp.float32,
                                -bound, bound)
    conv_b = jax.random.uniform(ks[5], (MID_HIDDEN,), jnp.float32, -bound, bound)
    gn_gamma = 1.0 + 0.1 * jax.random.normal(ks[6], (MID_HIDDEN,), jnp.float32)
    gn_beta = 0.1 * jax.random.normal(ks[7], (MID_HIDDEN,), jnp.float32)

    out = spinconv_block_forward(x, index, delta, src,
                                 conv_w, conv_b, gn_gamma, gn_beta)
    out = jax.block_until_ready(out)
    assert out.shape == (OUT_SIZE, MID_HIDDEN)

    # (1) tight check vs a reference whose conv operands are bf16-quantized the
    #     same way the kernel's are (isolates the kernel implementation).
    ref_q = reference_forward(x, index, delta, src, conv_w, conv_b,
                              gn_gamma, gn_beta, bf16_matmul_operands=True)
    if not jnp.allclose(out, ref_q, rtol=2e-3, atol=2e-3):
        raise AssertionError(
            f"mismatch vs bf16-operand reference: "
            f"max abs err = {jnp.max(jnp.abs(out - ref_q))}")

    # (2) sanity check vs the exact f32 reference (tolerance covers the bf16
    #     quantization of the MXU operands).
    ref = reference_forward(x, index, delta, src, conv_w, conv_b,
                            gn_gamma, gn_beta, bf16_matmul_operands=False)
    if not jnp.allclose(out, ref, rtol=2e-2, atol=2e-2):
        raise AssertionError(
            f"mismatch vs exact f32 reference: "
            f"max abs err = {jnp.max(jnp.abs(out - ref))}")

    print("KERNEL_OK")
</pallas_src>

<mosaic_0001>
module attributes {stable_mosaic.version = 11 : i64} {
  func.func @spinconv_kernel(%arg0: memref<168x64xf32, #tpu.memory_space<vmem>>, %arg1: memref<512x32xbf16, #tpu.memory_space<vmem>>, %arg2: memref<8x32xf32, #tpu.memory_space<vmem>>) attributes {dimension_semantics = [], scalar_prefetch = 0 : i64, scratch_operands = 0 : i64, tpu.core_type = #tpu.core_type<tc>} {
    %cst = arith.constant 0.000000e+00 : f32
    %0 = vector.broadcast %cst : f32 to vector<64x32xf32>
    %c0 = arith.constant 0 : index
    %c0_0 = arith.constant 0 : index
    %1 = vector.load %arg0[%c0, %c0_0] : memref<168x64xf32, #tpu.memory_space<vmem>>, vector<64x64xf32>
    %2 = arith.truncf %1 : vector<64x64xf32> to vector<64x64xbf16>
    %c0_1 = arith.constant 0 : index
    %c0_2 = arith.constant 0 : index
    %3 = vector.load %arg1[%c0_1, %c0_2] : memref<512x32xbf16, #tpu.memory_space<vmem>>, vector<64x32xbf16>
    %cst_3 = arith.constant dense<0.000000e+00> : vector<64x32xf32>
    %4 = tpu.matmul %2, %3, %cst_3 {dimension_numbers = #tpu.dot_dimension_numbers<[1], [0], [0], [1], [0, 0, 1, 1], [], []>} : vector<64x64xbf16>, vector<64x32xbf16>, vector<64x32xf32> -> vector<64x32xf32>
    %5 = arith.addf %0, %4 : vector<64x32xf32>
    %c8 = arith.constant 8 : index
    %c0_4 = arith.constant 0 : index
    %6 = vector.load %arg0[%c8, %c0_4] : memref<168x64xf32, #tpu.memory_space<vmem>>, vector<64x64xf32>
    %7 = arith.truncf %6 : vector<64x64xf32> to vector<64x64xbf16>
    %c64 = arith.constant 64 : index
    %c0_5 = arith.constant 0 : index
    %8 = vector.load %arg1[%c64, %c0_5] : memref<512x32xbf16, #tpu.memory_space<vmem>>, vector<64x32xbf16>
    %cst_6 = arith.constant dense<0.000000e+00> : vector<64x32xf32>
    %9 = tpu.matmul %7, %8, %cst_6 {dimension_numbers = #tpu.dot_dimension_numbers<[1], [0], [0], [1], [0, 0, 1, 1], [], []>} : vector<64x64xbf16>, vector<64x32xbf16>, vector<64x32xf32> -> vector<64x32xf32>
    %10 = arith.addf %5, %9 : vector<64x32xf32>
    %c16 = arith.constant 16 : index
    %c0_7 = arith.constant 0 : index
    %11 = vector.load %arg0[%c16, %c0_7] : memref<168x64xf32, #tpu.memory_space<vmem>>, vector<64x64xf32>
    %12 = arith.truncf %11 : vector<64x64xf32> to vector<64x64xbf16>
    %c128 = arith.constant 128 : index
    %c0_8 = arith.constant 0 : index
    %13 = vector.load %arg1[%c128, %c0_8] : memref<512x32xbf16, #tpu.memory_space<vmem>>, vector<64x32xbf16>
    %cst_9 = arith.constant dense<0.000000e+00> : vector<64x32xf32>
    %14 = tpu.matmul %12, %13, %cst_9 {dimension_numbers = #tpu.dot_dimension_numbers<[1], [0], [0], [1], [0, 0, 1, 1], [], []>} : vector<64x64xbf16>, vector<64x32xbf16>, vector<64x32xf32> -> vector<64x32xf32>
    %15 = arith.addf %10, %14 : vector<64x32xf32>
    %c24 = arith.constant 24 : index
    %c0_10 = arith.constant 0 : index
    %16 = vector.load %arg0[%c24, %c0_10] : memref<168x64xf32, #tpu.memory_space<vmem>>, vector<64x64xf32>
    %17 = arith.truncf %16 : vector<64x64xf32> to vector<64x64xbf16>
    %c192 = arith.constant 192 : index
    %c0_11 = arith.constant 0 : index
    %18 = vector.load %arg1[%c192, %c0_11] : memref<512x32xbf16, #tpu.memory_space<vmem>>, vector<64x32xbf16>
    %cst_12 = arith.constant dense<0.000000e+00> : vector<64x32xf32>
    %19 = tpu.matmul %17, %18, %cst_12 {dimension_numbers = #tpu.dot_dimension_numbers<[1], [0], [0], [1], [0, 0, 1, 1], [], []>} : vector<64x64xbf16>, vector<64x32xbf16>, vector<64x32xf32> -> vector<64x32xf32>
    %20 = arith.addf %15, %19 : vector<64x32xf32>
    %c32 = arith.constant 32 : index
    %c0_13 = arith.constant 0 : index
    %21 = vector.load %arg0[%c32, %c0_13] : memref<168x64xf32, #tpu.memory_space<vmem>>, vector<64x64xf32>
    %22 = arith.truncf %21 : vector<64x64xf32> to vector<64x64xbf16>
    %c256 = arith.constant 256 : index
    %c0_14 = arith.constant 0 : index
    %23 = vector.load %arg1[%c256, %c0_14] : memref<512x32xbf16, #tpu.memory_space<vmem>>, vector<64x32xbf16>
    %cst_15 = arith.constant dense<0.000000e+00> : vector<64x32xf32>
    %24 = tpu.matmul %22, %23, %cst_15 {dimension_numbers = #tpu.dot_dimension_numbers<[1], [0], [0], [1], [0, 0, 1, 1], [], []>} : vector<64x64xbf16>, vector<64x32xbf16>, vector<64x32xf32> -> vector<64x32xf32>
    %25 = arith.addf %20, %24 : vector<64x32xf32>
    %c40 = arith.constant 40 : index
    %c0_16 = arith.constant 0 : index
    %26 = vector.load %arg0[%c40, %c0_16] : memref<168x64xf32, #tpu.memory_space<vmem>>, vector<64x64xf32>
    %27 = arith.truncf %26 : vector<64x64xf32> to vector<64x64xbf16>
    %c320 = arith.constant 320 : index
    %c0_17 = arith.constant 0 : index
    %28 = vector.load %arg1[%c320, %c0_17] : memref<512x32xbf16, #tpu.memory_space<vmem>>, vector<64x32xbf16>
    %cst_18 = arith.constant dense<0.000000e+00> : vector<64x32xf32>
    %29 = tpu.matmul %27, %28, %cst_18 {dimension_numbers = #tpu.dot_dimension_numbers<[1], [0], [0], [1], [0, 0, 1, 1], [], []>} : vector<64x64xbf16>, vector<64x32xbf16>, vector<64x32xf32> -> vector<64x32xf32>
    %30 = arith.addf %25, %29 : vector<64x32xf32>
    %c48 = arith.constant 48 : index
    %c0_19 = arith.constant 0 : index
    %31 = vector.load %arg0[%c48, %c0_19] : memref<168x64xf32, #tpu.memory_space<vmem>>, vector<64x64xf32>
    %32 = arith.truncf %31 : vector<64x64xf32> to vector<64x64xbf16>
    %c384 = arith.constant 384 : index
    %c0_20 = arith.constant 0 : index
    %33 = vector.load %arg1[%c384, %c0_20] : memref<512x32xbf16, #tpu.memory_space<vmem>>, vector<64x32xbf16>
    %cst_21 = arith.constant dense<0.000000e+00> : vector<64x32xf32>
    %34 = tpu.matmul %32, %33, %cst_21 {dimension_numbers = #tpu.dot_dimension_numbers<[1], [0], [0], [1], [0, 0, 1, 1], [], []>} : vector<64x64xbf16>, vector<64x32xbf16>, vector<64x32xf32> -> vector<64x32xf32>
    %35 = arith.addf %30, %34 : vector<64x32xf32>
    %c56 = arith.constant 56 : index
    %c0_22 = arith.constant 0 : index
    %36 = vector.load %arg0[%c56, %c0_22] : memref<168x64xf32, #tpu.memory_space<vmem>>, vector<64x64xf32>
    %37 = arith.truncf %36 : vector<64x64xf32> to vector<64x64xbf16>
    %c448 = arith.constant 448 : index
    %c0_23 = arith.constant 0 : index
    %38 = vector.load %arg1[%c448, %c0_23] : memref<512x32xbf16, #tpu.memory_space<vmem>>, vector<64x32xbf16>
    %cst_24 = arith.constant dense<0.000000e+00> : vector<64x32xf32>
    %39 = tpu.matmul %37, %38, %cst_24 {dimension_numbers = #tpu.dot_dimension_numbers<[1], [0], [0], [1], [0, 0, 1, 1], [], []>} : vector<64x64xbf16>, vector<64x32xbf16>, vector<64x32xf32> -> vector<64x32xf32>
    %40 = arith.addf %35, %39 : vector<64x32xf32>
    %c128_25 = arith.constant 128 : index
    %c0_26 = arith.constant 0 : index
    %41 = vector.load %arg0[%c128_25, %c0_26] : memref<168x64xf32, #tpu.memory_space<vmem>>, vector<8x64xf32>
    %42 = vector.extract_strided_slice %41 {offsets = [0, 0], sizes = [1, 32], strides = [1, 1]} : vector<8x64xf32> to vector<1x32xf32>
    %43 = vector.extract_strided_slice %41 {offsets = [1, 0], sizes = [1, 32], strides = [1, 1]} : vector<8x64xf32> to vector<1x32xf32>
    %44 = vector.extract_strided_slice %41 {offsets = [2, 0], sizes = [1, 32], strides = [1, 1]} : vector<8x64xf32> to vector<1x32xf32>
    %45 = vector.broadcast %42 : vector<1x32xf32> to vector<64x32xf32>
    %46 = arith.addf %40, %45 : vector<64x32xf32>
    %47 = arith.negf %46 : vector<64x32xf32>
    %48 = math.exp %47 : vector<64x32xf32>
    %cst_27 = arith.constant 1.000000e+00 : f32
    %49 = vector.broadcast %cst_27 : f32 to vector<64x32xf32>
    %50 = arith.addf %49, %48 : vector<64x32xf32>
    %51 = arith.divf %49, %50 : vector<64x32xf32>
    %52 = arith.mulf %46, %51 : vector<64x32xf32>
    %53 = vector.shape_cast %52 : vector<64x32xf32> to vector<8x8x32xf32>
    %cst_28 = arith.constant dense<0.000000e+00> : vector<8x32xf32>
    %54 = vector.multi_reduction <add>, %53, %cst_28 [0] : vector<8x8x32xf32> to vector<8x32xf32>
    %cst_29 = arith.constant 8.000000e+00 : f32
    %55 = vector.broadcast %cst_29 : f32 to vector<8x32xf32>
    %56 = arith.divf %54, %55 : vector<8x32xf32>
    %c136 = arith.constant 136 : index
    %c0_30 = arith.constant 0 : index
    %57 = vector.load %arg0[%c136, %c0_30] : memref<168x64xf32, #tpu.memory_space<vmem>>, vector<32x64xf32>
    %58 = vector.extract_strided_slice %57 {offsets = [0, 0], sizes = [32, 32], strides = [1, 1]} : vector<32x64xf32> to vector<32x32xf32>
    %cst_31 = arith.constant dense<0.000000e+00> : vector<8x32xf32>
    %59 = tpu.matmul %56, %58, %cst_31 {dimension_numbers = #tpu.dot_dimension_numbers<[1], [0], [0], [1], [0, 0, 1, 1], [], []>} : vector<8x32xf32>, vector<32x32xf32>, vector<8x32xf32> -> vector<8x32xf32>
    %60 = arith.subf %56, %59 : vector<8x32xf32>
    %61 = arith.mulf %60, %60 : vector<8x32xf32>
    %cst_32 = arith.constant dense<0.000000e+00> : vector<8x32xf32>
    %62 = tpu.matmul %61, %58, %cst_32 {dimension_numbers = #tpu.dot_dimension_numbers<[1], [0], [0], [1], [0, 0, 1, 1], [], []>} : vector<8x32xf32>, vector<32x32xf32>, vector<8x32xf32> -> vector<8x32xf32>
    %cst_33 = arith.constant 9.99999974E-6 : f32
    %63 = vector.broadcast %cst_33 : f32 to vector<8x32xf32>
    %64 = arith.addf %62, %63 : vector<8x32xf32>
    %65 = math.rsqrt %64 : vector<8x32xf32>
    %66 = arith.mulf %60, %65 : vector<8x32xf32>
    %67 = vector.broadcast %43 : vector<1x32xf32> to vector<8x32xf32>
    %68 = arith.mulf %66, %67 : vector<8x32xf32>
    %69 = vector.broadcast %44 : vector<1x32xf32> to vector<8x32xf32>
    %70 = arith.addf %68, %69 : vector<8x32xf32>
    %c0_34 = arith.constant 0 : index
    %c0_35 = arith.constant 0 : index
    %71 = vector.load %arg2[%c0_34, %c0_35] : memref<8x32xf32, #tpu.memory_space<vmem>>, vector<8x32xf32>
    tpu.vector_store %arg2[%c0_34, %c0_35], %70 {strides = array<i32>} : memref<8x32xf32, #tpu.memory_space<vmem>>, vector<8x32xf32>,
    return
  }
}

</mosaic_0001>

<llo_original>
// kernel: spinconv_block_forward.1
$region0: #{spinconv_block_forward.1}
  #allocation0 [shape = 'u32[]', space=smem, size = 0x4, offset = 0x4, fixed_abs, tag = 'smem constant byte address 0x4 - core index']
  #allocation1 [shape = 'u32[72,128]{1,0:T(1,128)}', space=vmem, size = 0x9000, scoped, tag = 'internal scratch']
  %s0 = inlined_call_operand.vmem [shape: f32[168,64], index: 0, kind: input, shape index: {}]
  %s1 = inlined_call_operand.vmem [shape: bf16[512,32], index: 1, kind: input, shape index: {}]
  %s2 = inlined_call_operand.hbm [shape: f32[8,32], index: 2, kind: output, shape index: {}]
  %s3 = sld [smem:[#allocation0]]
  $region18: #{spinconv_block_forward.1} parent=0
    _
  %s5 = ssub.s32 1, %s3
  %s6 = scalar_select 0, %s5, %s3
  $region1: #{spinconv_block_forward.1} parent=0
    #allocation2 [shape = 'u8[4096]{0}', space=vmem, size = 0x1000, scoped, tag = 'output window, operand 0, single buffered']
    #allocation3 [shape = 's32[1]{0}', space=sflag, size = 0x4, scoped, tag = 'scoped memory for spinconv_block_forward.1']
    %7 = vsyncpa [#allocation3], 0
    // Predicated region
    $region2: #{spinconv_block_forward.1} parent=1 // pred_check
      _
    $region3: #{spinconv_block_forward.1} parent=1 // pred_check_branch
      %9 = sbr.rel (0) target = $region5
    $region4: #{spinconv_block_forward.1} parent=1 // pred_region
      _
    $region5: #{spinconv_block_forward.1} parent=1 // pred_fallthru
      _
    // Predicated region
    $region6: #{spinconv_block_forward.1} parent=1 // pred_check
      _
    $region7: #{spinconv_block_forward.1} parent=1 // pred_check_branch
      %11 = sbr.rel (0) target = $region9
    $region8: #{spinconv_block_forward.1} parent=1 // pred_region
      _
    $region9: #{spinconv_block_forward.1} parent=1 // pred_fallthru
      _
    %v13 = vld [vmem:[%s0] sm:$0xff]
    %v14 = vld [vmem:[%s0 + $0x8] sm:$0xff]
    %v15 = vld [vmem:[%s0 + $0x10] sm:$0xff]
    %v16 = vld [vmem:[%s0 + $0x18] sm:$0xff]
    %v17 = vld [vmem:[%s0 + $0x20] sm:$0xff]
    %v18 = vld [vmem:[%s0 + $0x28] sm:$0xff]
    %v19 = vld [vmem:[%s0 + $0x30] sm:$0xff]
    %v20 = vld [vmem:[%s0 + $0x38] sm:$0xff]
    %v21 = vpack.c.bf16 %v14, %v13
    %v22 = vpack.c.bf16 %v16, %v15
    %v23 = vpack.c.bf16 %v18, %v17
    %v24 = vpack.c.bf16 %v20, %v19
    %v25 = vld [vmem:[%s1] sm:$0xf]
    %v26 = vld [vmem:[%s1 + $0x4] sm:$0xf]
    %v27 = vld [vmem:[%s1 + $0x8] sm:$0xf]
    %v28 = vld [vmem:[%s1 + $0xc] sm:$0xf]
    %v29 = vld [vmem:[%s1 + $0x10] sm:$0xf]
    %v30 = vld [vmem:[%s1 + $0x14] sm:$0xf]
    %v31 = vld [vmem:[%s1 + $0x18] sm:$0xf]
    %v32 = vld [vmem:[%s1 + $0x1c] sm:$0xf]
    %v33 = vld [vmem:[%s0 + $0x40] sm:$0xff]
    %v34 = vpack.c.bf16 %v15, %v14
    %v35 = vpack.c.bf16 %v17, %v16
    %v36 = vpack.c.bf16 %v19, %v18
    %v37 = vpack.c.bf16 %v33, %v20
    %v38 = vld [vmem:[%s1 + $0x20] sm:$0xf]
    %v39 = vld [vmem:[%s1 + $0x24] sm:$0xf]
    %v40 = vld [vmem:[%s1 + $0x28] sm:$0xf]
    %v41 = vld [vmem:[%s1 + $0x2c] sm:$0xf]
    %v42 = vld [vmem:[%s1 + $0x30] sm:$0xf]
    %v43 = vld [vmem:[%s1 + $0x34] sm:$0xf]
    %v44 = vld [vmem:[%s1 + $0x38] sm:$0xf]
    %v45 = vld [vmem:[%s1 + $0x3c] sm:$0xf]
    %v54 = vunpack.c.l.b16 %v38
    %v55 = vunpack.c.l.b16 %v39
    %v56 = vunpack.c.l.b16 %v40
    %v57 = vunpack.c.l.b16 %v41
    %v58 = vunpack.c.l.b16 %v42
    %v59 = vunpack.c.l.b16 %v43
    %v60 = vunpack.c.l.b16 %v44
    %v61 = vunpack.c.l.b16 %v45
    %v62 = vpack.c.b16 %v55, %v54
    %v63 = vpack.c.b16 %v57, %v56
    %v64 = vpack.c.b16 %v59, %v58
    %v65 = vpack.c.b16 %v61, %v60
    %vm70 = vcmask 523264
    %v72 = vsel %vm70, %v34, 0
    %v75 = vsel %vm70, %v35, 0
    %v78 = vsel %vm70, %v36, 0
    %v81 = vsel %vm70, %v37, 0
    %83 = vmatpush.bf16.msra.mxu0 0
    %84 = vmatpush.bf16.msra.mxu0 0
    %85 = vmatpush.bf16.msra.mxu0 0
    %86 = vmatpush.bf16.msra.mxu0 0
    %87 = vmatpush.bf16.msra.mxu0 %v65
    %88 = vmatpush.bf16.msra.mxu0 %v64
    %89 = vmatpush.bf16.msra.mxu0 %v63
    %90 = vmatpush.bf16.msra.mxu0 %v62
    %91 = vmatmul.bf16.gmra.mxu0 %v72
    %v92 = vpop.f32.mrf.mxu0
    %v93 = vadd.f32 0.0, %v92
    %v94 = vpop.f32.mrf.mxu0
    %v95 = vadd.f32 0.0, %v94
    %96 = vmatmul.bf16.gmra.mxu0 %v75
    %v97 = vpop.f32.mrf.mxu0
    %v98 = vadd.f32 0.0, %v97
    %v99 = vpop.f32.mrf.mxu0
    %v100 = vadd.f32 0.0, %v99
    %101 = vmatmul.bf16.gmra.mxu0 %v78
    %v102 = vpop.f32.mrf.mxu0
    %v103 = vadd.f32 0.0, %v102
    %v104 = vpop.f32.mrf.mxu0
    %v105 = vadd.f32 0.0, %v104
    %106 = vmatmul.bf16.gmra.mxu0 %v81
    %v107 = vpop.f32.mrf.mxu0
    %v108 = vadd.f32 0.0, %v107
    %v109 = vpop.f32.mrf.mxu0
    %v110 = vadd.f32 0.0, %v109
    %111 = vdwg.mxu0
    %v120 = vunpack.c.l.b16 %v25
    %v121 = vunpack.c.l.b16 %v26
    %v122 = vunpack.c.l.b16 %v27
    %v123 = vunpack.c.l.b16 %v28
    %v124 = vunpack.c.l.b16 %v29
    %v125 = vunpack.c.l.b16 %v30
    %v126 = vunpack.c.l.b16 %v31
    %v127 = vunpack.c.l.b16 %v32
    %v128 = vpack.c.b16 %v121, %v120
    %v129 = vpack.c.b16 %v123, %v122
    %v130 = vpack.c.b16 %v125, %v124
    %v131 = vpack.c.b16 %v127, %v126
    %v137 = vsel %vm70, %v21, 0
    %v140 = vsel %vm70, %v22, 0
    %v143 = vsel %vm70, %v23, 0
    %v146 = vsel %vm70, %v24, 0
    %148 = vmatpush.bf16.msra.mxu0 0
    %149 = vmatpush.bf16.msra.mxu0 0
    %150 = vmatpush.bf16.msra.mxu0 0
    %151 = vmatpush.bf16.msra.mxu0 0
    %152 = vmatpush.bf16.msra.mxu0 %v131
    %153 = vmatpush.bf16.msra.mxu0 %v130
    %154 = vmatpush.bf16.msra.mxu0 %v129
    %155 = vmatpush.bf16.msra.mxu0 %v128
    %156 = vmatmul.bf16.gmra.mxu0 %v137
    %v157 = vpop.f32.mrf.mxu0
    %v158 = vadd.f32 %v93, %v157
    %v159 = vpop.f32.mrf.mxu0
    %v160 = vadd.f32 %v95, %v159
    %161 = vmatmul.bf16.gmra.mxu0 %v140
    %v162 = vpop.f32.mrf.mxu0
    %v163 = vadd.f32 %v98, %v162
    %v164 = vpop.f32.mrf.mxu0
    %v165 = vadd.f32 %v100, %v164
    %166 = vmatmul.bf16.gmra.mxu0 %v143
    %v167 = vpop.f32.mrf.mxu0
    %v168 = vadd.f32 %v103, %v167
    %v169 = vpop.f32.mrf.mxu0
    %v170 = vadd.f32 %v105, %v169
    %171 = vmatmul.bf16.gmra.mxu0 %v146
    %v172 = vpop.f32.mrf.mxu0
    %v173 = vadd.f32 %v108, %v172
    %v174 = vpop.f32.mrf.mxu0
    %v175 = vadd.f32 %v110, %v174
    %176 = vdwg.mxu0
    %v177 = vld [vmem:[%s0 + $0x10] sm:$0xff]
    %v178 = vld [vmem:[%s0 + $0x18] sm:$0xff]
    %v179 = vld [vmem:[%s0 + $0x20] sm:$0xff]
    %v180 = vld [vmem:[%s0 + $0x28] sm:$0xff]
    %v181 = vld [vmem:[%s0 + $0x30] sm:$0xff]
    %v182 = vld [vmem:[%s0 + $0x38] sm:$0xff]
    %v183 = vld [vmem:[%s0 + $0x40] sm:$0xff]
    %v184 = vld [vmem:[%s0 + $0x48] sm:$0xff]
    %v185 = vpack.c.bf16 %v178, %v177
    %v186 = vpack.c.bf16 %v180, %v179
    %v187 = vpack.c.bf16 %v182, %v181
    %v188 = vpack.c.bf16 %v184, %v183
    %v189 = vld [vmem:[%s1 + $0x40] sm:$0xf]
    %v190 = vld [vmem:[%s1 + $0x44] sm:$0xf]
    %v191 = vld [vmem:[%s1 + $0x48] sm:$0xf]
    %v192 = vld [vmem:[%s1 + $0x4c] sm:$0xf]
    %v193 = vld [vmem:[%s1 + $0x50] sm:$0xf]
    %v194 = vld [vmem:[%s1 + $0x54] sm:$0xf]
    %v195 = vld [vmem:[%s1 + $0x58] sm:$0xf]
    %v196 = vld [vmem:[%s1 + $0x5c] sm:$0xf]
    %v205 = vunpack.c.l.b16 %v189
    %v206 = vunpack.c.l.b16 %v190
    %v207 = vunpack.c.l.b16 %v191
    %v208 = vunpack.c.l.b16 %v192
    %v209 = vunpack.c.l.b16 %v193
    %v210 = vunpack.c.l.b16 %v194
    %v211 = vunpack.c.l.b16 %v195
    %v212 = vunpack.c.l.b16 %v196
    %v213 = vpack.c.b16 %v206, %v205
    %v214 = vpack.c.b16 %v208, %v207
    %v215 = vpack.c.b16 %v210, %v209
    %v216 = vpack.c.b16 %v212, %v211
    %v222 = vsel %vm70, %v185, 0
    %v225 = vsel %vm70, %v186, 0
    %v228 = vsel %vm70, %v187, 0
    %v231 = vsel %vm70, %v188, 0
    %233 = vmatpush.bf16.msra.mxu0 0
    %234 = vmatpush.bf16.msra.mxu0 0
    %235 = vmatpush.bf16.msra.mxu0 0
    %236 = vmatpush.bf16.msra.mxu0 0
    %237 = vmatpush.bf16.msra.mxu0 %v216
    %238 = vmatpush.bf16.msra.mxu0 %v215
    %239 = vmatpush.bf16.msra.mxu0 %v214
    %240 = vmatpush.bf16.msra.mxu0 %v213
    %241 = vmatmul.bf16.gmra.mxu0 %v222
    %v242 = vpop.f32.mrf.mxu0
    %v243 = vadd.f32 0.0, %v242
    %v244 = vpop.f32.mrf.mxu0
    %v245 = vadd.f32 0.0, %v244
    %246 = vmatmul.bf16.gmra.mxu0 %v225
    %v247 = vpop.f32.mrf.mxu0
    %v248 = vadd.f32 0.0, %v247
    %v249 = vpop.f32.mrf.mxu0
    %v250 = vadd.f32 0.0, %v249
    %251 = vmatmul.bf16.gmra.mxu0 %v228
    %v252 = vpop.f32.mrf.mxu0
    %v253 = vadd.f32 0.0, %v252
    %v254 = vpop.f32.mrf.mxu0
    %v255 = vadd.f32 0.0, %v254
    %256 = vmatmul.bf16.gmra.mxu0 %v231
    %v257 = vpop.f32.mrf.mxu0
    %v258 = vadd.f32 0.0, %v257
    %v259 = vpop.f32.mrf.mxu0
    %v260 = vadd.f32 0.0, %v259
    %261 = vdwg.mxu0
    %v262 = vadd.f32 %v158, %v243
    %v263 = vadd.f32 %v160, %v245
    %v264 = vadd.f32 %v163, %v248
    %v265 = vadd.f32 %v165, %v250
    %v266 = vadd.f32 %v168, %v253
    %v267 = vadd.f32 %v170, %v255
    %v268 = vadd.f32 %v173, %v258
    %v269 = vadd.f32 %v175, %v260
    %v270 = vld [vmem:[%s0 + $0x18] sm:$0xff]
    %v271 = vld [vmem:[%s0 + $0x20] sm:$0xff]
    %v272 = vld [vmem:[%s0 + $0x28] sm:$0xff]
    %v273 = vld [vmem:[%s0 + $0x30] sm:$0xff]
    %v274 = vld [vmem:[%s0 + $0x38] sm:$0xff]
    %v275 = vld [vmem:[%s0 + $0x40] sm:$0xff]
    %v276 = vld [vmem:[%s0 + $0x48] sm:$0xff]
    %v277 = vld [vmem:[%s0 + $0x50] sm:$0xff]
    %v278 = vpack.c.bf16 %v271, %v270
    %v279 = vpack.c.bf16 %v273, %v272
    %v280 = vpack.c.bf16 %v275, %v274
    %v281 = vpack.c.bf16 %v277, %v276
    %v282 = vld [vmem:[%s1 + $0x60] sm:$0xf]
    %v283 = vld [vmem:[%s1 + $0x64] sm:$0xf]
    %v284 = vld [vmem:[%s1 + $0x68] sm:$0xf]
    %v285 = vld [vmem:[%s1 + $0x6c] sm:$0xf]
    %v286 = vld [vmem:[%s1 + $0x70] sm:$0xf]
    %v287 = vld [vmem:[%s1 + $0x74] sm:$0xf]
    %v288 = vld [vmem:[%s1 + $0x78] sm:$0xf]
    %v289 = vld [vmem:[%s1 + $0x7c] sm:$0xf]
    %v298 = vunpack.c.l.b16 %v282
    %v299 = vunpack.c.l.b16 %v283
    %v300 = vunpack.c.l.b16 %v284
    %v301 = vunpack.c.l.b16 %v285
    %v302 = vunpack.c.l.b16 %v286
    %v303 = vunpack.c.l.b16 %v287
    %v304 = vunpack.c.l.b16 %v288
    %v305 = vunpack.c.l.b16 %v289
    %v306 = vpack.c.b16 %v299, %v298
    %v307 = vpack.c.b16 %v301, %v300
    %v308 = vpack.c.b16 %v303, %v302
    %v309 = vpack.c.b16 %v305, %v304
    %v315 = vsel %vm70, %v278, 0
    %v318 = vsel %vm70, %v279, 0
    %v321 = vsel %vm70, %v280, 0
    %v324 = vsel %vm70, %v281, 0
    %326 = vmatpush.bf16.msra.mxu0 0
    %327 = vmatpush.bf16.msra.mxu0 0
    %328 = vmatpush.bf16.msra.mxu0 0
    %329 = vmatpush.bf16.msra.mxu0 0
    %330 = vmatpush.bf16.msra.mxu0 %v309
    %331 = vmatpush.bf16.msra.mxu0 %v308
    %332 = vmatpush.bf16.msra.mxu0 %v307
    %333 = vmatpush.bf16.msra.mxu0 %v306
    %334 = vmatmul.bf16.gmra.mxu0 %v315
    %v335 = vpop.f32.mrf.mxu0
    %v336 = vadd.f32 0.0, %v335
    %v337 = vpop.f32.mrf.mxu0
    %v338 = vadd.f32 0.0, %v337
    %339 = vmatmul.bf16.gmra.mxu0 %v318
    %v340 = vpop.f32.mrf.mxu0
    %v341 = vadd.f32 0.0, %v340
    %v342 = vpop.f32.mrf.mxu0
    %v343 = vadd.f32 0.0, %v342
    %344 = vmatmul.bf16.gmra.mxu0 %v321
    %v345 = vpop.f32.mrf.mxu0
    %v346 = vadd.f32 0.0, %v345
    %v347 = vpop.f32.mrf.mxu0
    %v348 = vadd.f32 0.0, %v347
    %349 = vmatmul.bf16.gmra.mxu0 %v324
    %v350 = vpop.f32.mrf.mxu0
    %v351 = vadd.f32 0.0, %v350
    %v352 = vpop.f32.mrf.mxu0
    %v353 = vadd.f32 0.0, %v352
    %354 = vdwg.mxu0
    %v355 = vadd.f32 %v262, %v336
    %v356 = vadd.f32 %v263, %v338
    %v357 = vadd.f32 %v264, %v341
    %v358 = vadd.f32 %v265, %v343
    %v359 = vadd.f32 %v266, %v346
    %v360 = vadd.f32 %v267, %v348
    %v361 = vadd.f32 %v268, %v351
    %v362 = vadd.f32 %v269, %v353
    %v363 = vld [vmem:[%s0 + $0x20] sm:$0xff]
    %v364 = vld [vmem:[%s0 + $0x28] sm:$0xff]
    %v365 = vld [vmem:[%s0 + $0x30] sm:$0xff]
    %v366 = vld [vmem:[%s0 + $0x38] sm:$0xff]
    %v367 = vld [vmem:[%s0 + $0x40] sm:$0xff]
    %v368 = vld [vmem:[%s0 + $0x48] sm:$0xff]
    %v369 = vld [vmem:[%s0 + $0x50] sm:$0xff]
    %v370 = vld [vmem:[%s0 + $0x58] sm:$0xff]
    %v371 = vpack.c.bf16 %v364, %v363
    %v372 = vpack.c.bf16 %v366, %v365
    %v373 = vpack.c.bf16 %v368, %v367
    %v374 = vpack.c.bf16 %v370, %v369
    %v375 = vld [vmem:[%s1 + $0x80] sm:$0xf]
    %v376 = vld [vmem:[%s1 + $0x84] sm:$0xf]
    %v377 = vld [vmem:[%s1 + $0x88] sm:$0xf]
    %v378 = vld [vmem:[%s1 + $0x8c] sm:$0xf]
    %v379 = vld [vmem:[%s1 + $0x90] sm:$0xf]
    %v380 = vld [vmem:[%s1 + $0x94] sm:$0xf]
    %v381 = vld [vmem:[%s1 + $0x98] sm:$0xf]
    %v382 = vld [vmem:[%s1 + $0x9c] sm:$0xf]
    %v391 = vunpack.c.l.b16 %v375
    %v392 = vunpack.c.l.b16 %v376
    %v393 = vunpack.c.l.b16 %v377
    %v394 = vunpack.c.l.b16 %v378
    %v395 = vunpack.c.l.b16 %v379
    %v396 = vunpack.c.l.b16 %v380
    %v397 = vunpack.c.l.b16 %v381
    %v398 = vunpack.c.l.b16 %v382
    %v399 = vpack.c.b16 %v392, %v391
    %v400 = vpack.c.b16 %v394, %v393
    %v401 = vpack.c.b16 %v396, %v395
    %v402 = vpack.c.b16 %v398, %v397
    %v408 = vsel %vm70, %v371, 0
    %v411 = vsel %vm70, %v372, 0
    %v414 = vsel %vm70, %v373, 0
    %v417 = vsel %vm70, %v374, 0
    %419 = vmatpush.bf16.msra.mxu0 0
    %420 = vmatpush.bf16.msra.mxu0 0
    %421 = vmatpush.bf16.msra.mxu0 0
    %422 = vmatpush.bf16.msra.mxu0 0
    %423 = vmatpush.bf16.msra.mxu0 %v402
    %424 = vmatpush.bf16.msra.mxu0 %v401
    %425 = vmatpush.bf16.msra.mxu0 %v400
    %426 = vmatpush.bf16.msra.mxu0 %v399
    %427 = vmatmul.bf16.gmra.mxu0 %v408
    %v428 = vpop.f32.mrf.mxu0
    %v429 = vadd.f32 0.0, %v428
    %v430 = vpop.f32.mrf.mxu0
    %v431 = vadd.f32 0.0, %v430
    %432 = vmatmul.bf16.gmra.mxu0 %v411
    %v433 = vpop.f32.mrf.mxu0
    %v434 = vadd.f32 0.0, %v433
    %v435 = vpop.f32.mrf.mxu0
    %v436 = vadd.f32 0.0, %v435
    %437 = vmatmul.bf16.gmra.mxu0 %v414
    %v438 = vpop.f32.mrf.mxu0
    %v439 = vadd.f32 0.0, %v438
    %v440 = vpop.f32.mrf.mxu0
    %v441 = vadd.f32 0.0, %v440
    %442 = vmatmul.bf16.gmra.mxu0 %v417
    %v443 = vpop.f32.mrf.mxu0
    %v444 = vadd.f32 0.0, %v443
    %v445 = vpop.f32.mrf.mxu0
    %v446 = vadd.f32 0.0, %v445
    %447 = vdwg.mxu0
    %v448 = vadd.f32 %v355, %v429
    %v449 = vadd.f32 %v356, %v431
    %v450 = vadd.f32 %v357, %v434
    %v451 = vadd.f32 %v358, %v436
    %v452 = vadd.f32 %v359, %v439
    %v453 = vadd.f32 %v360, %v441
    %v454 = vadd.f32 %v361, %v444
    %v455 = vadd.f32 %v362, %v446
    %v456 = vld [vmem:[%s0 + $0x28] sm:$0xff]
    %v457 = vld [vmem:[%s0 + $0x30] sm:$0xff]
    %v458 = vld [vmem:[%s0 + $0x38] sm:$0xff]
    %v459 = vld [vmem:[%s0 + $0x40] sm:$0xff]
    %v460 = vld [vmem:[%s0 + $0x48] sm:$0xff]
    %v461 = vld [vmem:[%s0 + $0x50] sm:$0xff]
    %v462 = vld [vmem:[%s0 + $0x58] sm:$0xff]
    %v463 = vld [vmem:[%s0 + $0x60] sm:$0xff]
    %v464 = vpack.c.bf16 %v457, %v456
    %v465 = vpack.c.bf16 %v459, %v458
    %v466 = vpack.c.bf16 %v461, %v460
    %v467 = vpack.c.bf16 %v463, %v462
    %v468 = vld [vmem:[%s1 + $0xa0] sm:$0xf]
    %v469 = vld [vmem:[%s1 + $0xa4] sm:$0xf]
    %v470 = vld [vmem:[%s1 + $0xa8] sm:$0xf]
    %v471 = vld [vmem:[%s1 + $0xac] sm:$0xf]
    %v472 = vld [vmem:[%s1 + $0xb0] sm:$0xf]
    %v473 = vld [vmem:[%s1 + $0xb4] sm:$0xf]
    %v474 = vld [vmem:[%s1 + $0xb8] sm:$0xf]
    %v475 = vld [vmem:[%s1 + $0xbc] sm:$0xf]
    %v484 = vunpack.c.l.b16 %v468
    %v485 = vunpack.c.l.b16 %v469
    %v486 = vunpack.c.l.b16 %v470
    %v487 = vunpack.c.l.b16 %v471
    %v488 = vunpack.c.l.b16 %v472
    %v489 = vunpack.c.l.b16 %v473
    %v490 = vunpack.c.l.b16 %v474
    %v491 = vunpack.c.l.b16 %v475
    %v492 = vpack.c.b16 %v485, %v484
    %v493 = vpack.c.b16 %v487, %v486
    %v494 = vpack.c.b16 %v489, %v488
    %v495 = vpack.c.b16 %v491, %v490
    %v501 = vsel %vm70, %v464, 0
    %v504 = vsel %vm70, %v465, 0
    %v507 = vsel %vm70, %v466, 0
    %v510 = vsel %vm70, %v467, 0
    %512 = vmatpush.bf16.msra.mxu0 0
    %513 = vmatpush.bf16.msra.mxu0 0
    %514 = vmatpush.bf16.msra.mxu0 0
    %515 = vmatpush.bf16.msra.mxu0 0
    %516 = vmatpush.bf16.msra.mxu0 %v495
    %517 = vmatpush.bf16.msra.mxu0 %v494
    %518 = vmatpush.bf16.msra.mxu0 %v493
    %519 = vmatpush.bf16.msra.mxu0 %v492
    %520 = vmatmul.bf16.gmra.mxu0 %v501
    %v521 = vpop.f32.mrf.mxu0
    %v522 = vadd.f32 0.0, %v521
    %v523 = vpop.f32.mrf.mxu0
    %v524 = vadd.f32 0.0, %v523
    %525 = vmatmul.bf16.gmra.mxu0 %v504
    %v526 = vpop.f32.mrf.mxu0
    %v527 = vadd.f32 0.0, %v526
    %v528 = vpop.f32.mrf.mxu0
    %v529 = vadd.f32 0.0, %v528
    %530 = vmatmul.bf16.gmra.mxu0 %v507
    %v531 = vpop.f32.mrf.mxu0
    %v532 = vadd.f32 0.0, %v531
    %v533 = vpop.f32.mrf.mxu0
    %v534 = vadd.f32 0.0, %v533
    %535 = vmatmul.bf16.gmra.mxu0 %v510
    %v536 = vpop.f32.mrf.mxu0
    %v537 = vadd.f32 0.0, %v536
    %v538 = vpop.f32.mrf.mxu0
    %v539 = vadd.f32 0.0, %v538
    %540 = vdwg.mxu0
    %v541 = vadd.f32 %v448, %v522
    %v542 = vadd.f32 %v449, %v524
    %v543 = vadd.f32 %v450, %v527
    %v544 = vadd.f32 %v451, %v529
    %v545 = vadd.f32 %v452, %v532
    %v546 = vadd.f32 %v453, %v534
    %v547 = vadd.f32 %v454, %v537
    %v548 = vadd.f32 %v455, %v539
    %v549 = vld [vmem:[%s0 + $0x30] sm:$0xff]
    %v550 = vld [vmem:[%s0 + $0x38] sm:$0xff]
    %v551 = vld [vmem:[%s0 + $0x40] sm:$0xff]
    %v552 = vld [vmem:[%s0 + $0x48] sm:$0xff]
    %v553 = vld [vmem:[%s0 + $0x50] sm:$0xff]
    %v554 = vld [vmem:[%s0 + $0x58] sm:$0xff]
    %v555 = vld [vmem:[%s0 + $0x60] sm:$0xff]
    %v556 = vld [vmem:[%s0 + $0x68] sm:$0xff]
    %v557 = vpack.c.bf16 %v550, %v549
    %v558 = vpack.c.bf16 %v552, %v551
    %v559 = vpack.c.bf16 %v554, %v553
    %v560 = vpack.c.bf16 %v556, %v555
    %v561 = vld [vmem:[%s1 + $0xc0] sm:$0xf]
    %v562 = vld [vmem:[%s1 + $0xc4] sm:$0xf]
    %v563 = vld [vmem:[%s1 + $0xc8] sm:$0xf]
    %v564 = vld [vmem:[%s1 + $0xcc] sm:$0xf]
    %v565 = vld [vmem:[%s1 + $0xd0] sm:$0xf]
    %v566 = vld [vmem:[%s1 + $0xd4] sm:$0xf]
    %v567 = vld [vmem:[%s1 + $0xd8] sm:$0xf]
    %v568 = vld [vmem:[%s1 + $0xdc] sm:$0xf]
    %v577 = vunpack.c.l.b16 %v561
    %v578 = vunpack.c.l.b16 %v562
    %v579 = vunpack.c.l.b16 %v563
    %v580 = vunpack.c.l.b16 %v564
    %v581 = vunpack.c.l.b16 %v565
    %v582 = vunpack.c.l.b16 %v566
    %v583 = vunpack.c.l.b16 %v567
    %v584 = vunpack.c.l.b16 %v568
    %v585 = vpack.c.b16 %v578, %v577
    %v586 = vpack.c.b16 %v580, %v579
    %v587 = vpack.c.b16 %v582, %v581
    %v588 = vpack.c.b16 %v584, %v583
    %v594 = vsel %vm70, %v557, 0
    %v597 = vsel %vm70, %v558, 0
    %v600 = vsel %vm70, %v559, 0
    %v603 = vsel %vm70, %v560, 0
    %605 = vmatpush.bf16.msra.mxu0 0
    %606 = vmatpush.bf16.msra.mxu0 0
    %607 = vmatpush.bf16.msra.mxu0 0
    %608 = vmatpush.bf16.msra.mxu0 0
    %609 = vmatpush.bf16.msra.mxu0 %v588
    %610 = vmatpush.bf16.msra.mxu0 %v587
    %611 = vmatpush.bf16.msra.mxu0 %v586
    %612 = vmatpush.bf16.msra.mxu0 %v585
    %613 = vmatmul.bf16.gmra.mxu0 %v594
    %v614 = vpop.f32.mrf.mxu0
    %v615 = vadd.f32 0.0, %v614
    %v616 = vpop.f32.mrf.mxu0
    %v617 = vadd.f32 0.0, %v616
    %618 = vmatmul.bf16.gmra.mxu0 %v597
    %v619 = vpop.f32.mrf.mxu0
    %v620 = vadd.f32 0.0, %v619
    %v621 = vpop.f32.mrf.mxu0
    %v622 = vadd.f32 0.0, %v621
    %623 = vmatmul.bf16.gmra.mxu0 %v600
    %v624 = vpop.f32.mrf.mxu0
    %v625 = vadd.f32 0.0, %v624
    %v626 = vpop.f32.mrf.mxu0
    %v627 = vadd.f32 0.0, %v626
    %628 = vmatmul.bf16.gmra.mxu0 %v603
    %v629 = vpop.f32.mrf.mxu0
    %v630 = vadd.f32 0.0, %v629
    %v631 = vpop.f32.mrf.mxu0
    %v632 = vadd.f32 0.0, %v631
    %633 = vdwg.mxu0
    %v634 = vadd.f32 %v541, %v615
    %v635 = vadd.f32 %v542, %v617
    %v636 = vadd.f32 %v543, %v620
    %v637 = vadd.f32 %v544, %v622
    %v638 = vadd.f32 %v545, %v625
    %v639 = vadd.f32 %v546, %v627
    %v640 = vadd.f32 %v547, %v630
    %v641 = vadd.f32 %v548, %v632
    %v642 = vld [vmem:[%s0 + $0x38] sm:$0xff]
    %v643 = vld [vmem:[%s0 + $0x40] sm:$0xff]
    %v644 = vld [vmem:[%s0 + $0x48] sm:$0xff]
    %v645 = vld [vmem:[%s0 + $0x50] sm:$0xff]
    %v646 = vld [vmem:[%s0 + $0x58] sm:$0xff]
    %v647 = vld [vmem:[%s0 + $0x60] sm:$0xff]
    %v648 = vld [vmem:[%s0 + $0x68] sm:$0xff]
    %v649 = vld [vmem:[%s0 + $0x70] sm:$0xff]
    %v650 = vpack.c.bf16 %v643, %v642
    %v651 = vpack.c.bf16 %v645, %v644
    %v652 = vpack.c.bf16 %v647, %v646
    %v653 = vpack.c.bf16 %v649, %v648
    %v654 = vld [vmem:[%s1 + $0xe0] sm:$0xf]
    %v655 = vld [vmem:[%s1 + $0xe4] sm:$0xf]
    %v656 = vld [vmem:[%s1 + $0xe8] sm:$0xf]
    %v657 = vld [vmem:[%s1 + $0xec] sm:$0xf]
    %v658 = vld [vmem:[%s1 + $0xf0] sm:$0xf]
    %v659 = vld [vmem:[%s1 + $0xf4] sm:$0xf]
    %v660 = vld [vmem:[%s1 + $0xf8] sm:$0xf]
    %v661 = vld [vmem:[%s1 + $0xfc] sm:$0xf]
    %v670 = vunpack.c.l.b16 %v654
    %v671 = vunpack.c.l.b16 %v655
    %v672 = vunpack.c.l.b16 %v656
    %v673 = vunpack.c.l.b16 %v657
    %v674 = vunpack.c.l.b16 %v658
    %v675 = vunpack.c.l.b16 %v659
    %v676 = vunpack.c.l.b16 %v660
    %v677 = vunpack.c.l.b16 %v661
    %v678 = vpack.c.b16 %v671, %v670
    %v679 = vpack.c.b16 %v673, %v672
    %v680 = vpack.c.b16 %v675, %v674
    %v681 = vpack.c.b16 %v677, %v676
    %v687 = vsel %vm70, %v650, 0
    %v690 = vsel %vm70, %v651, 0
    %v693 = vsel %vm70, %v652, 0
    %v696 = vsel %vm70, %v653, 0
    %698 = vmatpush.bf16.msra.mxu0 0
    %699 = vmatpush.bf16.msra.mxu0 0
    %700 = vmatpush.bf16.msra.mxu0 0
    %701 = vmatpush.bf16.msra.mxu0 0
    %702 = vmatpush.bf16.msra.mxu0 %v681
    %703 = vmatpush.bf16.msra.mxu0 %v680
    %704 = vmatpush.bf16.msra.mxu0 %v679
    %705 = vmatpush.bf16.msra.mxu0 %v678
    %706 = vmatmul.bf16.gmra.mxu0 %v687
    %v707 = vpop.f32.mrf.mxu0
    %v708 = vadd.f32 0.0, %v707
    %v709 = vpop.f32.mrf.mxu0
    %v710 = vadd.f32 0.0, %v709
    %711 = vmatmul.bf16.gmra.mxu0 %v690
    %v712 = vpop.f32.mrf.mxu0
    %v713 = vadd.f32 0.0, %v712
    %v714 = vpop.f32.mrf.mxu0
    %v715 = vadd.f32 0.0, %v714
    %716 = vmatmul.bf16.gmra.mxu0 %v693
    %v717 = vpop.f32.mrf.mxu0
    %v718 = vadd.f32 0.0, %v717
    %v719 = vpop.f32.mrf.mxu0
    %v720 = vadd.f32 0.0, %v719
    %721 = vmatmul.bf16.gmra.mxu0 %v696
    %v722 = vpop.f32.mrf.mxu0
    %v723 = vadd.f32 0.0, %v722
    %v724 = vpop.f32.mrf.mxu0
    %v725 = vadd.f32 0.0, %v724
    %726 = vdwg.mxu0
    %v727 = vadd.f32 %v634, %v708
    %v728 = vadd.f32 %v635, %v710
    %v729 = vadd.f32 %v636, %v713
    %v730 = vadd.f32 %v637, %v715
    %v731 = vadd.f32 %v638, %v718
    %v732 = vadd.f32 %v639, %v720
    %v733 = vadd.f32 %v640, %v723
    %v734 = vadd.f32 %v641, %v725
    %v735 = vld [vmem:[%s0 + $0x80] sm:$0xff]
    %v736 = vperm.slane %v735, 0
    %v737 = vadd.f32 %v727, %v736
    %v738 = vadd.f32 %v728, %v736
    %v739 = vadd.f32 %v729, %v736
    %v740 = vadd.f32 %v730, %v736
    %v741 = vadd.f32 %v731, %v736
    %v742 = vadd.f32 %v732, %v736
    %v743 = vadd.f32 %v733, %v736
    %v744 = vadd.f32 %v734, %v736
    %v745 = vxor.u32 %v737, 2147483648
    %v746 = vxor.u32 %v738, 2147483648
    %v747 = vxor.u32 %v739, 2147483648
    %v748 = vxor.u32 %v740, 2147483648
    %v749 = vxor.u32 %v741, 2147483648
    %v750 = vxor.u32 %v742, 2147483648
    %v751 = vxor.u32 %v743, 2147483648
    %v752 = vxor.u32 %v744, 2147483648
    %v753 = vmul.f32 %v745, 1.442695
    %v754 = vpow.pop %v753
    %v755 = vmul.f32 %v746, 1.442695
    %v756 = vpow.pop %v755
    %v757 = vmul.f32 %v747, 1.442695
    %v758 = vpow.pop %v757
    %v759 = vmul.f32 %v748, 1.442695
    %v760 = vpow.pop %v759
    %v761 = vmul.f32 %v749, 1.442695
    %v762 = vpow.pop %v761
    %v763 = vmul.f32 %v750, 1.442695
    %v764 = vpow.pop %v763
    %v765 = vmul.f32 %v751, 1.442695
    %v766 = vpow.pop %v765
    %v767 = vmul.f32 %v752, 1.442695
    %v768 = vpow.pop %v767
    %v769 = vadd.f32 %v754, 1.0
    %v770 = vadd.f32 %v756, 1.0
    %v771 = vadd.f32 %v758, 1.0
    %v772 = vadd.f32 %v760, 1.0
    %v773 = vadd.f32 %v762, 1.0
    %v774 = vadd.f32 %v764, 1.0
    %v775 = vadd.f32 %v766, 1.0
    %v776 = vadd.f32 %v768, 1.0
    %v777 = vrcp.pop %v769
    %v778 = vmul.f32 %v769, %v777
    %v779 = vsub.f32 1.0, %v778
    %v780 = vmul.f32 %v777, %v779
    %v781 = vadd.f32 %v777, %v780
    %vm782 = vweird.f32 %v769
    %vm783 = vweird.f32 %v777
    %vm784 = vmor %vm782, %vm783
    %v785 = vsel %vm784, %v777, %v781
    %v786 = vand.u32 2147483647, %v769
    %vm787 = vcmp.eq.f32.partialorder %v786, 8.507059e+37
    %v788 = vand.u32 %v769, 2147483648
    %v789 = vor.u32 1.1754944e-38, %v788
    %v790 = vsel %vm787, %v789, %v785
    %v791 = vmul.f32 1.0, %v790
    %v792 = vrcp.pop %v770
    %v793 = vmul.f32 %v770, %v792
    %v794 = vsub.f32 1.0, %v793
    %v795 = vmul.f32 %v792, %v794
    %v796 = vadd.f32 %v792, %v795
    %vm797 = vweird.f32 %v770
    %vm798 = vweird.f32 %v792
    %vm799 = vmor %vm797, %vm798
    %v800 = vsel %vm799, %v792, %v796
    %v801 = vand.u32 2147483647, %v770
    %vm802 = vcmp.eq.f32.partialorder %v801, 8.507059e+37
    %v803 = vand.u32 %v770, 2147483648
    %v804 = vor.u32 1.1754944e-38, %v803
    %v805 = vsel %vm802, %v804, %v800
    %v806 = vmul.f32 1.0, %v805
    %v807 = vrcp.pop %v771
    %v808 = vmul.f32 %v771, %v807
    %v809 = vsub.f32 1.0, %v808
    %v810 = vmul.f32 %v807, %v809
    %v811 = vadd.f32 %v807, %v810
    %vm812 = vweird.f32 %v771
    %vm813 = vweird.f32 %v807
    %vm814 = vmor %vm812, %vm813
    %v815 = vsel %vm814, %v807, %v811
    %v816 = vand.u32 2147483647, %v771
    %vm817 = vcmp.eq.f32.partialorder %v816, 8.507059e+37
    %v818 = vand.u32 %v771, 2147483648
    %v819 = vor.u32 1.1754944e-38, %v818
    %v820 = vsel %vm817, %v819, %v815
    %v821 = vmul.f32 1.0, %v820
    %v822 = vrcp.pop %v772
    %v823 = vmul.f32 %v772, %v822
    %v824 = vsub.f32 1.0, %v823
    %v825 = vmul.f32 %v822, %v824
    %v826 = vadd.f32 %v822, %v825
    %vm827 = vweird.f32 %v772
    %vm828 = vweird.f32 %v822
    %vm829 = vmor %vm827, %vm828
    %v830 = vsel %vm829, %v822, %v826
    %v831 = vand.u32 2147483647, %v772
    %vm832 = vcmp.eq.f32.partialorder %v831, 8.507059e+37
    %v833 = vand.u32 %v772, 2147483648
    %v834 = vor.u32 1.1754944e-38, %v833
    %v835 = vsel %vm832, %v834, %v830
    %v836 = vmul.f32 1.0, %v835
    %v837 = vrcp.pop %v773
    %v838 = vmul.f32 %v773, %v837
    %v839 = vsub.f32 1.0, %v838
    %v840 = vmul.f32 %v837, %v839
    %v841 = vadd.f32 %v837, %v840
    %vm842 = vweird.f32 %v773
    %vm843 = vweird.f32 %v837
    %vm844 = vmor %vm842, %vm843
    %v845 = vsel %vm844, %v837, %v841
    %v846 = vand.u32 2147483647, %v773
    %vm847 = vcmp.eq.f32.partialorder %v846, 8.507059e+37
    %v848 = vand.u32 %v773, 2147483648
    %v849 = vor.u32 1.1754944e-38, %v848
    %v850 = vsel %vm847, %v849, %v845
    %v851 = vmul.f32 1.0, %v850
    %v852 = vrcp.pop %v774
    %v853 = vmul.f32 %v774, %v852
    %v854 = vsub.f32 1.0, %v853
    %v855 = vmul.f32 %v852, %v854
    %v856 = vadd.f32 %v852, %v855
    %vm857 = vweird.f32 %v774
    %vm858 = vweird.f32 %v852
    %vm859 = vmor %vm857, %vm858
    %v860 = vsel %vm859, %v852, %v856
    %v861 = vand.u32 2147483647, %v774
    %vm862 = vcmp.eq.f32.partialorder %v861, 8.507059e+37
    %v863 = vand.u32 %v774, 2147483648
    %v864 = vor.u32 1.1754944e-38, %v863
    %v865 = vsel %vm862, %v864, %v860
    %v866 = vmul.f32 1.0, %v865
    %v867 = vrcp.pop %v775
    %v868 = vmul.f32 %v775, %v867
    %v869 = vsub.f32 1.0, %v868
    %v870 = vmul.f32 %v867, %v869
    %v871 = vadd.f32 %v867, %v870
    %vm872 = vweird.f32 %v775
    %vm873 = vweird.f32 %v867
    %vm874 = vmor %vm872, %vm873
    %v875 = vsel %vm874, %v867, %v871
    %v876 = vand.u32 2147483647, %v775
    %vm877 = vcmp.eq.f32.partialorder %v876, 8.507059e+37
    %v878 = vand.u32 %v775, 2147483648
    %v879 = vor.u32 1.1754944e-38, %v878
    %v880 = vsel %vm877, %v879, %v875
    %v881 = vmul.f32 1.0, %v880
    %v882 = vrcp.pop %v776
    %v883 = vmul.f32 %v776, %v882
    %v884 = vsub.f32 1.0, %v883
    %v885 = vmul.f32 %v882, %v884
    %v886 = vadd.f32 %v882, %v885
    %vm887 = vweird.f32 %v776
    %vm888 = vweird.f32 %v882
    %vm889 = vmor %vm887, %vm888
    %v890 = vsel %vm889, %v882, %v886
    %v891 = vand.u32 2147483647, %v776
    %vm892 = vcmp.eq.f32.partialorder %v891, 8.507059e+37
    %v893 = vand.u32 %v776, 2147483648
    %v894 = vor.u32 1.1754944e-38, %v893
    %v895 = vsel %vm892, %v894, %v890
    %v896 = vmul.f32 1.0, %v895
    %v897 = vmul.f32 %v737, %v791
    %v898 = vmul.f32 %v738, %v806
    %v899 = vmul.f32 %v739, %v821
    %v900 = vmul.f32 %v740, %v836
    %v901 = vmul.f32 %v741, %v851
    %v902 = vmul.f32 %v742, %v866
    %v903 = vmul.f32 %v743, %v881
    %v904 = vmul.f32 %v744, %v896
    %vm905 = vcmask 261120
    %v906 = vsel %vm905, %v897, 0.0
    %v907 = vsel %vm905, %v898, 0.0
    %v908 = vadd.f32 %v906, %v907
    %v909 = vsel %vm905, %v899, 0.0
    %v910 = vadd.f32 %v908, %v909
    %v911 = vsel %vm905, %v900, 0.0
    %v912 = vadd.f32 %v910, %v911
    %v913 = vsel %vm905, %v901, 0.0
    %v914 = vadd.f32 %v912, %v913
    %v915 = vsel %vm905, %v902, 0.0
    %v916 = vadd.f32 %v914, %v915
    %v917 = vsel %vm905, %v903, 0.0
    %v918 = vadd.f32 %v916, %v917
    %v919 = vsel %vm905, %v904, 0.0
    %v920 = vadd.f32 %v918, %v919
    %v921 = vrcp.pop 8.0
    %v922 = vmul.f32 8.0, %v921
    %v923 = vsub.f32 1.0, %v922
    %v924 = vmul.f32 %v921, %v923
    %v925 = vadd.f32 %v921, %v924
    %vm926 = vweird.f32 %v921
    %v927 = vsel %vm926, %v921, %v925
    %v928 = vmul.f32 %v920, %v927
    %v929 = vld [vmem:[%s0 + $0x88] sm:$0xff]
    %v930 = vld [vmem:[%s0 + $0x90] sm:$0xff]
    %v931 = vld [vmem:[%s0 + $0x98] sm:$0xff]
    %v932 = vld [vmem:[%s0 + $0xa0] sm:$0xff]
    %v934 = vsel %vm905, %v928, 0
    %936 = vmatpush.msra.mxu0 0.0
    %937 = vmatpush.msra.mxu0 0.0
    %938 = vmatpush.msra.mxu0 0.0
    %939 = vmatpush.msra.mxu0 0.0
    %940 = vmatpush.msra.mxu0 0.0
    %941 = vmatpush.msra.mxu0 0.0
    %942 = vmatpush.msra.mxu0 0.0
    %943 = vmatpush.msra.mxu0 0.0
    %944 = vmatpush.msra.mxu0 0.0
    %945 = vmatpush.msra.mxu0 0.0
    %946 = vmatpush.msra.mxu0 0.0
    %947 = vmatpush.msra.mxu0 0.0
    %948 = vmatpush.msra.mxu0 %v932
    %949 = vmatpush.msra.mxu0 %v931
    %950 = vmatpush.msra.mxu0 %v930
    %951 = vmatpush.msra.mxu0 %v929
    %952 = vmatmul.f32.gmra.mxu0 %v934
    %v953 = vpop.f32.mrf.mxu0
    %v954 = vadd.f32 0.0, %v953
    %955 = vdwg.mxu0
    %v956 = vsub.f32 %v928, %v954
    %v957 = vmul.f32 %v956, %v956
    %v959 = vsel %vm905, %v957, 0
    %961 = vmatpush.msra.mxu0 0.0
    %962 = vmatpush.msra.mxu0 0.0
    %963 = vmatpush.msra.mxu0 0.0
    %964 = vmatpush.msra.mxu0 0.0
    %965 = vmatpush.msra.mxu0 0.0
    %966 = vmatpush.msra.mxu0 0.0
    %967 = vmatpush.msra.mxu0 0.0
    %968 = vmatpush.msra.mxu0 0.0
    %969 = vmatpush.msra.mxu0 0.0
    %970 = vmatpush.msra.mxu0 0.0
    %971 = vmatpush.msra.mxu0 0.0
    %972 = vmatpush.msra.mxu0 0.0
    %973 = vmatpush.msra.mxu0 %v932
    %974 = vmatpush.msra.mxu0 %v931
    %975 = vmatpush.msra.mxu0 %v930
    %976 = vmatpush.msra.mxu0 %v929
    %977 = vmatmul.f32.gmra.mxu0 %v959
    %v978 = vpop.f32.mrf.mxu0
    %v979 = vadd.f32 1e-05, %v978
    %980 = vdwg.mxu0
    %v981 = vrsqrt.pop %v979
    %v982 = vmul.f32 %v981, %v979
    %v983 = vmul.f32 %v982, %v981
    %v984 = vmul.f32 0.5, %v983
    %v985 = vsub.f32 1.5, %v984
    %v986 = vmul.f32 %v981, %v985
    %vm987 = vweird.f32 %v979
    %vm988 = vweird.f32 %v981
    %vm989 = vmor %vm987, %vm988
    %v990 = vsel %vm989, %v981, %v986
    %v991 = vmul.f32 %v956, %v990
    %v992 = vperm.slane %v735, 1
    %v993 = vmul.f32 %v991, %v992
    %v994 = vperm.slane %v735, 2
    %v995 = vadd.f32 %v993, %v994
    %996 = vst.msk [vmem:[#allocation2] sm:$0xff] %vm905, %v995
    // Predicated region
    $region10: #{spinconv_block_forward.1} parent=1 // pred_check
      _
    $region11: #{spinconv_block_forward.1} parent=1 // pred_check_branch
      %998 = sbr.rel (0) target = $region13
    $region12: #{spinconv_block_forward.1} parent=1 // pred_region
      %1000 = vsyncadd [#allocation3], 0
      %s1002 = sshll.u32 [#allocation2], 4
      %s1003 = int_to_ptr.vmem [resolvable:$true] %s1002
      %s1004 = sshll.u32 %s2, 4
      %s1005 = int_to_ptr.hbm [resolvable:$true] %s1004
      %1007 = dma.vmem_to_hbm [thread:$0]  %s1003, 128, %s1005, [#allocation3]
    $region13: #{spinconv_block_forward.1} parent=1 // pred_fallthru
      _
    // Predicated region
    $region14: #{spinconv_block_forward.1} parent=1 // pred_check
      _
    $region15: #{spinconv_block_forward.1} parent=1 // pred_check_branch
      %1009 = sbr.rel (0) target = $region17
    $region16: #{spinconv_block_forward.1} parent=1 // pred_region
      %1011 = dma.done [#allocation3], 128
    $region17: #{spinconv_block_forward.1} parent=1 // pred_fallthru
      _
    %1012 = vsyncpa [#allocation3], 1

</llo_original>
